<compile_context>
chip_gen: v5e
topology: v5e:2x2
jax: 0.10.0
libtpu: 0.0.40
codegen_flags: <defaults>
</compile_context>

<pallas_src>
import jax
import jax.numpy as jnp
from jax import lax
from jax.experimental import pallas as pl
from jax.experimental.pallas import tpu as pltpu


def make_inv_freq(dim: int) -> jax.Array:
    # Deterministic buffer init, identical to the PyTorch __init__.
    return (
        1.0 / (10000.0 ** (jnp.arange(0, dim, 2, dtype=jnp.float32) / dim))
    ).astype(jnp.float32)


def _rotary_kernel(coef_ref, out_ref):
    """out[r, l] = (row0 + r) * coef[0, l] + coef[1, l]

    With coef[0, l] = fold * inv_full[l % dim] and
         coef[1, l] = (l // dim) * inv_full[l % dim]
    this equals ((row0 + r) * fold + l // dim) * inv_full[l % dim], i.e. the
    folded rotary table.  One broadcast mul + add feeding the store.
    """
    rows, width = out_ref.shape
    row0 = pl.program_id(0) * rows  # global folded-row offset of this tile
    row = (lax.broadcasted_iota(jnp.int32, (rows, width), 0) + row0).astype(
        jnp.float32
    )
    out_ref[...] = row * coef_ref[0:1, :] + coef_ref[1:2, :]


def _choose_tile_rows(rows: int, width: int, target_bytes: int) -> int:
    """Rows per output block: ~target_bytes, multiple of 8 sublanes, and at
    least 4 grid steps when there is enough work (so both v7x TCs get tiles)."""
    if rows <= 8:
        return rows
    ts = (target_bytes // (width * 4)) // 8 * 8
    if rows >= 32:
        ts = min(ts, (rows // 4) // 8 * 8)
    ts = max(8, ts)
    return rows if ts >= rows else ts


def rotary_embedding(
    max_seq_len: int,
    inv_freq: jax.Array,
    *,
    target_block_bytes: int = 2 << 20,
    tile_rows: int | None = None,
) -> jax.Array:
    half = int(inv_freq.shape[0])
    dim = 2 * half

    # Lane-dense folding: pack `fold` consecutive seq rows into one >=128-lane row.
    fold = max(1, -(-128 // dim))              # ceil(128 / dim)
    padded_len = -(-max_seq_len // fold) * fold
    if padded_len > (1 << 24):
        # seq index is reconstructed in f32 inside the kernel; exact only <= 2^24.
        raise ValueError("max_seq_len too large for exact f32 rotary table")
    rows = padded_len // fold
    width = fold * dim

    # (2, width) coefficient table: out = row_f32 * coef[0] + coef[1].
    inv_full = jnp.concatenate([inv_freq, inv_freq]).astype(jnp.float32)  # (dim,)
    inv_tiled = jnp.tile(inv_full, fold)                                  # (width,)
    off = jnp.repeat(jnp.arange(fold, dtype=jnp.float32), dim)            # (width,)
    coef = jnp.stack([jnp.float32(fold) * inv_tiled, off * inv_tiled])    # (2, width)

    # Pick output tile rows (multiple of 8 sublanes, or the full extent).
    if tile_rows is None:
        ts = _choose_tile_rows(rows, width, target_block_bytes)
    else:
        ts = max(8, (int(tile_rows) // 8) * 8)
        ts = rows if ts >= rows else ts

    grid = (pl.cdiv(rows, ts),)

    out_folded = pl.pallas_call(
        _rotary_kernel,
        out_shape=jax.ShapeDtypeStruct((rows, width), jnp.float32),
        grid=grid,
        in_specs=[
            pl.BlockSpec((2, width), lambda i: (0, 0)),  # coef stays resident
        ],
        out_specs=pl.BlockSpec((ts, width), lambda i: (i, 0)),
        compiler_params=pltpu.CompilerParams(
            dimension_semantics=("parallel",)
        ),
        cost_estimate=pl.CostEstimate(
            flops=2 * rows * width,
            transcendentals=0,
            bytes_accessed=rows * width * 4 + 2 * width * 4,
        ),
    )(coef)

    # Free row-major layout plumbing back to the PyTorch output shape.
    out = out_folded.reshape(padded_len, dim)
    if padded_len != max_seq_len:
        out = out[:max_seq_len]
    return out


def _reference(max_seq_len: int, inv_freq: jax.Array) -> jax.Array:
    seq = jnp.arange(max_seq_len, dtype=jnp.float32)
    freqs = jnp.einsum("i,j->ij", seq, inv_freq)
    return jnp.concatenate([freqs, freqs], axis=-1)


if __name__ == "__main__":
    # Forward has no tensor inputs (only max_seq_len); key kept for convention.
    _ = jax.random.PRNGKey(0)

    cases = [
        dict(dim=32, max_seq_len=8),                   # tiny, fold=4, single block
        dict(dim=64, max_seq_len=4096),                # fold=2, multi-tile grid
        dict(dim=32, max_seq_len=7),                   # padding path (S % fold != 0)
        dict(dim=64, max_seq_len=600, tile_rows=32),   # partial last output block
        dict(dim=128, max_seq_len=64),                 # fold=1 (dim >= 128 lanes)
    ]
    for case in cases:
        dim = case["dim"]
        S = case["max_seq_len"]
        inv_freq = make_inv_freq(dim)
        out = rotary_embedding(S, inv_freq, tile_rows=case.get("tile_rows"))
        out = jax.block_until_ready(out)

        ref = _reference(S, inv_freq)
        assert out.shape == (S, dim), (out.shape, (S, dim))
        assert out.dtype == jnp.float32
        assert jnp.allclose(out, ref, atol=1e-6, rtol=1e-6), (dim, S)

    # TODO(synk): if the consumer immediately takes cos/sin (and/or bf16-casts)
    # of this table, fuse that in-kernel to halve bytes written.
    print("KERNEL_OK")
</pallas_src>

<mosaic_0001>
module attributes {stable_mosaic.version = 11 : i64} {
  func.func @_rotary_kernel(%arg0: i32, %arg1: memref<2x128xf32, #tpu.memory_space<vmem>>, %arg2: memref<2x128xf32, #tpu.memory_space<vmem>>) attributes {dimension_semantics = [#tpu.dimension_semantics<parallel>], iteration_bounds = array<i64: 1>, scalar_prefetch = 0 : i64, scratch_operands = 0 : i64, tpu.core_type = #tpu.core_type<tc>, window_params = [{pipeline_mode = #tpu.pipeline_mode<synchronous>, transform_indices = @transform_0, window_bounds = array<i64: 2, 128>}, {transform_indices = @transform_1, window_bounds = array<i64: 2, 128>}]} {
    %c2_i32 = arith.constant 2 : i32
    %0 = arith.muli %arg0, %c2_i32 : i32
    %1 = tpu.iota {dimensions = array<i32: 0>} : vector<2x128xi32>
    %2 = vector.broadcast %0 : i32 to vector<2x128xi32>
    %3 = arith.addi %1, %2 : vector<2x128xi32>
    %4 = arith.sitofp %3 : vector<2x128xi32> to vector<2x128xf32>
    %c0 = arith.constant 0 : index
    %c0_0 = arith.constant 0 : index
    %5 = vector.load %arg1[%c0, %c0_0] : memref<2x128xf32, #tpu.memory_space<vmem>>, vector<1x128xf32>
    %6 = vector.broadcast %5 : vector<1x128xf32> to vector<2x128xf32>
    %7 = arith.mulf %4, %6 : vector<2x128xf32>
    %c1 = arith.constant 1 : index
    %c0_1 = arith.constant 0 : index
    %8 = vector.load %arg1[%c1, %c0_1] : memref<2x128xf32, #tpu.memory_space<vmem>>, vector<1x128xf32>
    %9 = vector.broadcast %8 : vector<1x128xf32> to vector<2x128xf32>
    %10 = arith.addf %7, %9 : vector<2x128xf32>
    %c0_2 = arith.constant 0 : index
    %c0_3 = arith.constant 0 : index
    %11 = vector.load %arg2[%c0_2, %c0_3] : memref<2x128xf32, #tpu.memory_space<vmem>>, vector<2x128xf32>
    tpu.vector_store %arg2[%c0_2, %c0_3], %10 {strides = array<i32>} : memref<2x128xf32, #tpu.memory_space<vmem>>, vector<2x128xf32>,
    return
  }
  func.func @transform_0(%arg0: i32) -> (i32, i32) {
    %c0_i32 = arith.constant 0 : i32
    %c0_i32_0 = arith.constant 0 : i32
    %c0_i32_1 = arith.constant 0 : i32
    return %c0_i32, %c0_i32_0 : i32, i32
  }
  func.func @transform_1(%arg0: i32) -> (i32, i32) {
    %c0_i32 = arith.constant 0 : i32
    %c0_i32_0 = arith.constant 0 : i32
    return %arg0, %c0_i32 : i32, i32
  }
}

</mosaic_0001>

<llo_original>
// kernel: tpu_custom_call.1
$region0: #{tpu_custom_call.1}
  #allocation0 [shape = 'u32[]', space=smem, size = 0x4, offset = 0x4, fixed_abs, tag = 'smem constant byte address 0x4 - core index']
  #allocation1 [shape = 'u32[72,128]{1,0:T(1,128)}', space=vmem, size = 0x9000, scoped, tag = 'internal scratch']
  %s0 = inlined_call_operand.hbm [shape: f32[2,128], index: 0, kind: input, shape index: {}]
  %s1 = inlined_call_operand.hbm [shape: f32[2,128], index: 1, kind: output, shape index: {}]
  %s2 = sld [smem:[#allocation0]]
  $region18: #{tpu_custom_call.1} parent=0
    _
  %s4 = ssub.s32 1, %s2
  %s5 = scalar_select 0, %s4, %s2
  $region1: #{tpu_custom_call.1} parent=0
    #allocation2 [shape = 'u8[1024]{0}', space=vmem, size = 0x400, scoped, tag = 'input window, operand 0, single buffered']
    #allocation3 [shape = 's32[1]{0}', space=sflag, size = 0x4, scoped, tag = 'scoped memory for tpu_custom_call.1']
    #allocation4 [shape = 's32[1]{0}', space=sflag, size = 0x4, scoped, tag = 'scoped memory for tpu_custom_call.1']
    #allocation5 [shape = 'u8[1024]{0}', space=vmem, size = 0x400, scoped, tag = 'output window, operand 0, single buffered']
    %6 = vsyncpa [#allocation3], 0
    %7 = vsyncpa [#allocation4], 0
    // Predicated region
    $region2: #{tpu_custom_call.1} parent=1 // pred_check
      _
    $region3: #{tpu_custom_call.1} parent=1 // pred_check_branch
      %9 = sbr.rel (0) target = $region5
    $region4: #{tpu_custom_call.1} parent=1 // pred_region
      %11 = vsyncadd [#allocation3], 0
      %s13 = sshll.u32 %s0, 4
      %s14 = int_to_ptr.hbm [resolvable:$true] %s13
      %s15 = sshll.u32 [#allocation2], 4
      %s16 = int_to_ptr.vmem [resolvable:$true] %s15
      %18 = dma.hbm_to_vmem [thread:$0]  %s14, 32, %s16, [#allocation3]
    $region5: #{tpu_custom_call.1} parent=1 // pred_fallthru
      _
    // Predicated region
    $region6: #{tpu_custom_call.1} parent=1 // pred_check
      _
    $region7: #{tpu_custom_call.1} parent=1 // pred_check_branch
      %20 = sbr.rel (0) target = $region9
    $region8: #{tpu_custom_call.1} parent=1 // pred_region
      %22 = dma.done [#allocation3], 32
    $region9: #{tpu_custom_call.1} parent=1 // pred_fallthru
      _
    %s23 = smul.u32 0, 2
    %v24 = vlaneseq
    %v25 = vshrl.u32 %v24, 7
    %v26 = vstv %s23
    %v27 = vadd.s32 %v25, %v26
    %v28 = vcvt.s32.f32 %v27
    %v29 = vld [vmem:[#allocation2] sm:$0x1]
    %v30 = vperm.slane %v29, 0
    %v31 = vmul.f32 %v28, %v30
    %v32 = vld [vmem:[#allocation2 + $0x1] sm:$0x1]
    %v33 = vperm.slane %v32, 0
    %v34 = vadd.f32 %v31, %v33
    %35 = vst [vmem:[#allocation5] sm:$0x3] %v34
    // Predicated region
    $region10: #{tpu_custom_call.1} parent=1 // pred_check
      _
    $region11: #{tpu_custom_call.1} parent=1 // pred_check_branch
      %37 = sbr.rel (0) target = $region13
    $region12: #{tpu_custom_call.1} parent=1 // pred_region
      %39 = vsyncadd [#allocation4], 0
      %s41 = sshll.u32 [#allocation5], 4
      %s42 = int_to_ptr.vmem [resolvable:$true] %s41
      %s43 = sshll.u32 %s1, 4
      %s44 = int_to_ptr.hbm [resolvable:$true] %s43
      %46 = dma.vmem_to_hbm [thread:$0]  %s42, 32, %s44, [#allocation4]
    $region13: #{tpu_custom_call.1} parent=1 // pred_fallthru
      _
    // Predicated region
    $region14: #{tpu_custom_call.1} parent=1 // pred_check
      _
    $region15: #{tpu_custom_call.1} parent=1 // pred_check_branch
      %48 = sbr.rel (0) target = $region17
    $region16: #{tpu_custom_call.1} parent=1 // pred_region
      %50 = dma.done [#allocation4], 32
    $region17: #{tpu_custom_call.1} parent=1 // pred_fallthru
      _
    %51 = vsyncpa [#allocation3], 1
    %52 = vsyncpa [#allocation4], 1

</llo_original>
